<compile_context>
chip_gen: v5e
topology: v5e:2x2
jax: 0.10.0
libtpu: 0.0.40
codegen_flags: <defaults>
</compile_context>

<pallas_src>
import math

import jax
import jax.numpy as jnp
from jax import lax
from jax.experimental import pallas as pl
from jax.experimental.pallas import tpu as pltpu


# ----------------------------- config (small, lane-dense) -------------------
BATCH = 2
SEQ = 8
HIDDEN = 128          # multiple of 128 -> lane-dense activations
VOCAB = 512           # multiple of 128 -> lane-dense logits
INIT_RANGE = 0.02
LN_EPS = 1e-12


def _round_up(x, m):
    return (x + m - 1) // m * m


# ----------------------------- in-kernel math --------------------------------
def _gelu(x):
    # exact erf-based gelu (matches the torch reference `gelu`)
    return x * 0.5 * (1.0 + lax.erf(x * (1.0 / math.sqrt(2.0))))


def _layernorm(x, gamma, beta, eps=LN_EPS):
    # BertLayerNorm: mean / biased variance over the last dim.
    u = jnp.mean(x, axis=-1, keepdims=True)
    s = jnp.mean(jnp.square(x - u), axis=-1, keepdims=True)
    return (x - u) * lax.rsqrt(s + eps) * gamma + beta


# ----------------------------- Pallas kernel ---------------------------------
def lm_head_kernel(x_ref, wt_ref, bt_ref, g_ref, be_ref,
                   wd_ref, bias_ref, out_ref):
    # x_ref   : (tile_m, H)      f32   row tile of flattened hidden states
    # wt_ref  : (H, H)           bf16  dense weight, native torch [out, in]
    # bt_ref  : (1, H)           f32   dense bias
    # g_ref   : (1, H)           f32   LayerNorm gamma
    # be_ref  : (1, H)           f32   LayerNorm beta
    # wd_ref  : (tile_v, H)      bf16  tied embedding tile, native [vocab, H]
    # bias_ref: (1, tile_v)      f32   decoder output-bias tile
    # out_ref : (tile_m, tile_v)       logits tile

    # Cast activations to bf16 in-kernel (hidden under the MXU).
    x = x_ref[...].astype(jnp.bfloat16)

    # --- transform: dense (contract along the torch "in" dim) + gelu + LN ---
    # All elementwise math stays f32; recomputed per step (cheap H x H dot)
    # so there is no scratch dependence and both grid axes stay "parallel".
    h = lax.dot_general(x, wt_ref[...], (((1,), (1,)), ((), ())),
                        preferred_element_type=jnp.float32) + bt_ref[...]
    h = _gelu(h)
    h = _layernorm(h, g_ref[...], be_ref[...])

    # --- decoder: contract along H against the (tile_v, H) embedding tile ---
    logits = lax.dot_general(h.astype(jnp.bfloat16), wd_ref[...],
                             (((1,), (1,)), ((), ())),
                             preferred_element_type=jnp.float32)
    out_ref[...] = (logits + bias_ref[...]).astype(out_ref.dtype)


# ----------------------------- parameter packing -----------------------------
def pack_lm_head_params(params):
    """One-time layout/cast pass (hoisted out of the per-call path)."""
    H = params["dense_w"].shape[0]
    V = params["emb_w"].shape[0]
    return {
        "wt":   params["dense_w"].astype(jnp.bfloat16),          # (H, H) [out,in]
        "bt":   params["dense_b"].reshape(1, H).astype(jnp.float32),
        "g":    params["ln_g"].reshape(1, H).astype(jnp.float32),
        "be":   params["ln_b"].reshape(1, H).astype(jnp.float32),
        "wd":   params["emb_w"].astype(jnp.bfloat16),             # (V, H), no transpose
        "bias": params["bias"].reshape(1, V).astype(jnp.float32),
    }


# ----------------------------- VMEM budget -----------------------------------
def _vmem_limit_bytes(tile_m, tile_v, H, out_itemsize):
    # double-buffered streaming tiles
    streamed = 2 * (tile_m * H * 4            # x tile (f32)
                    + tile_v * H * 2          # decoder weight tile (bf16)
                    + tile_v * 4              # decoder bias tile (f32)
                    + tile_m * tile_v * out_itemsize)
    # single-buffered constant-index params
    resident = H * H * 2 + 3 * H * 4
    est = streamed + resident
    return int(min(100 << 20, max(8 << 20, 4 * est)))


# ----------------------------- wrapper ----------------------------------------
def bert_lm_prediction_head(hidden_states, packed, *,
                            tile_m=256, tile_v=512, out_dtype=jnp.float32):
    """hidden_states: (B, S, H) f32.  packed: pack_lm_head_params(...) output.

    Returns logits (B, S, V) in `out_dtype`.
    """
    B, S, H = hidden_states.shape
    V = packed["wd"].shape[0]
    assert H % 128 == 0, "hidden size must be lane-dense (multiple of 128)"
    assert V % 128 == 0, "vocab size must be lane-dense (multiple of 128)"

    M = B * S
    tile_m = min(tile_m, _round_up(M, 8))     # clamp to the (padded) row count
    M_pad = _round_up(M, tile_m)
    tile_v = min(tile_v, V)
    assert V % tile_v == 0

    x = hidden_states.reshape(M, H).astype(jnp.float32)
    if M_pad != M:
        x = jnp.pad(x, ((0, M_pad - M), (0, 0)))

    grid = (M_pad // tile_m, V // tile_v)
    const1 = pl.Buffered(1)   # constant-index inputs: no double buffer needed

    out2d = pl.pallas_call(
        lm_head_kernel,
        out_shape=jax.ShapeDtypeStruct((M_pad, V), out_dtype),
        grid_spec=pltpu.PrefetchScalarGridSpec(
            num_scalar_prefetch=0,
            grid=grid,
            in_specs=[
                pl.BlockSpec((tile_m, H), lambda m, v: (m, 0)),            # x rows
                pl.BlockSpec((H, H),      lambda m, v: (0, 0),
                             pipeline_mode=const1),                        # dense W
                pl.BlockSpec((1, H),      lambda m, v: (0, 0),
                             pipeline_mode=const1),                        # dense b
                pl.BlockSpec((1, H),      lambda m, v: (0, 0),
                             pipeline_mode=const1),                        # LN gamma
                pl.BlockSpec((1, H),      lambda m, v: (0, 0),
                             pipeline_mode=const1),                        # LN beta
                pl.BlockSpec((tile_v, H), lambda m, v: (v, 0)),            # decoder W
                pl.BlockSpec((1, tile_v), lambda m, v: (0, v)),            # decoder b
            ],
            out_specs=pl.BlockSpec((tile_m, tile_v), lambda m, v: (m, v)),
        ),
        compiler_params=pltpu.CompilerParams(
            dimension_semantics=("parallel", "parallel"),
            vmem_limit_bytes=_vmem_limit_bytes(
                tile_m, tile_v, H, jnp.dtype(out_dtype).itemsize)),
    )(x, packed["wt"], packed["bt"], packed["g"], packed["be"],
      packed["wd"], packed["bias"])

    if M_pad != M:
        out2d = out2d[:M]
    return out2d.reshape(B, S, V)


# ----------------------------- pure-JAX reference -----------------------------
def ref_lm_prediction_head(hidden_states, params):
    h = jnp.einsum("bsh,oh->bso", hidden_states, params["dense_w"]) \
        + params["dense_b"]
    h = _gelu(h)
    h = _layernorm(h, params["ln_g"], params["ln_b"])
    logits = jnp.einsum("bsh,vh->bsv", h, params["emb_w"]) + params["bias"]
    return logits


# ----------------------------- parameter init ---------------------------------
def init_params(key):
    k = iter(jax.random.split(key, 8))

    def normal(kk, shape, scale=INIT_RANGE):
        return (scale * jax.random.normal(kk, shape)).astype(jnp.float32)

    return {
        # BertPredictionHeadTransform
        "dense_w": normal(next(k), (HIDDEN, HIDDEN)),     # torch [out, in]
        "dense_b": normal(next(k), (HIDDEN,)),
        "ln_g":    jnp.ones((HIDDEN,), jnp.float32),
        "ln_b":    jnp.zeros((HIDDEN,), jnp.float32),
        # decoder: tied embedding weights [V, H] + output bias [V]
        "emb_w":   normal(next(k), (VOCAB, HIDDEN)),
        "bias":    normal(next(k), (VOCAB,)),
    }


# ----------------------------- main --------------------------------------------
if __name__ == "__main__":
    key = jax.random.PRNGKey(0)
    pkey, xkey = jax.random.split(key)

    params = init_params(pkey)
    packed = pack_lm_head_params(params)   # one-time layout/cast, off hot path
    hidden_states = jax.random.normal(
        xkey, (BATCH, SEQ, HIDDEN), dtype=jnp.float32)

    logits = bert_lm_prediction_head(hidden_states, packed)
    jax.block_until_ready(logits)

    assert logits.shape == (BATCH, SEQ, VOCAB)
    assert bool(jnp.all(jnp.isfinite(logits)))

    # Loose-tolerance check against the f32 reference (the MXU dots use bf16
    # operands, so ~1e-2-level relative differences are expected).
    ref = ref_lm_prediction_head(hidden_states, params)
    max_err = float(jnp.max(jnp.abs(logits.astype(jnp.float32) - ref)))
    scale = max(1.0, float(jnp.max(jnp.abs(ref))))
    assert max_err <= 5e-2 * scale, f"max_err={max_err}, scale={scale}"

    print("KERNEL_OK")
</pallas_src>

<mosaic_0001>
module attributes {stable_mosaic.version = 11 : i64} {
  func.func @lm_head_kernel(%arg0: i32, %arg1: i32, %arg2: memref<16x128xf32, #tpu.memory_space<vmem>>, %arg3: memref<128x128xbf16, #tpu.memory_space<vmem>>, %arg4: memref<1x128xf32, #tpu.memory_space<vmem>>, %arg5: memref<1x128xf32, #tpu.memory_space<vmem>>, %arg6: memref<1x128xf32, #tpu.memory_space<vmem>>, %arg7: memref<512x128xbf16, #tpu.memory_space<vmem>>, %arg8: memref<1x512xf32, #tpu.memory_space<vmem>>, %arg9: memref<16x512xf32, #tpu.memory_space<vmem>>) attributes {dimension_semantics = [#tpu.dimension_semantics<parallel>, #tpu.dimension_semantics<parallel>], iteration_bounds = array<i64: 1, 1>, scalar_prefetch = 0 : i64, scratch_operands = 0 : i64, tpu.core_type = #tpu.core_type<tc>, window_params = [{transform_indices = @transform_0, window_bounds = array<i64: 16, 128>}, {pipeline_mode = #tpu.pipeline_mode<synchronous>, transform_indices = @transform_1, window_bounds = array<i64: 128, 128>}, {pipeline_mode = #tpu.pipeline_mode<synchronous>, transform_indices = @transform_2, window_bounds = array<i64: 1, 128>}, {pipeline_mode = #tpu.pipeline_mode<synchronous>, transform_indices = @transform_3, window_bounds = array<i64: 1, 128>}, {pipeline_mode = #tpu.pipeline_mode<synchronous>, transform_indices = @transform_4, window_bounds = array<i64: 1, 128>}, {transform_indices = @transform_5, window_bounds = array<i64: 512, 128>}, {transform_indices = @transform_6, window_bounds = array<i64: 1, 512>}, {transform_indices = @transform_7, window_bounds = array<i64: 16, 512>}]} {
    %c0 = arith.constant 0 : index
    %c0_0 = arith.constant 0 : index
    %0 = vector.load %arg2[%c0, %c0_0] : memref<16x128xf32, #tpu.memory_space<vmem>>, vector<16x128xf32>
    %1 = arith.truncf %0 : vector<16x128xf32> to vector<16x128xbf16>
    %c0_1 = arith.constant 0 : index
    %c0_2 = arith.constant 0 : index
    %2 = vector.load %arg3[%c0_1, %c0_2] : memref<128x128xbf16, #tpu.memory_space<vmem>>, vector<128x128xbf16>
    %cst = arith.constant dense<0.000000e+00> : vector<16x128xf32>
    %3 = tpu.matmul %1, %2, %cst {dimension_numbers = #tpu.dot_dimension_numbers<[1], [1], [0], [0], [0, 0, 1, 0], [], []>} : vector<16x128xbf16>, vector<128x128xbf16>, vector<16x128xf32> -> vector<16x128xf32>
    %c0_3 = arith.constant 0 : index
    %c0_4 = arith.constant 0 : index
    %4 = vector.load %arg4[%c0_3, %c0_4] : memref<1x128xf32, #tpu.memory_space<vmem>>, vector<1x128xf32>
    %5 = vector.broadcast %4 : vector<1x128xf32> to vector<16x128xf32>
    %6 = arith.addf %3, %5 : vector<16x128xf32>
    %cst_5 = arith.constant 5.000000e-01 : f32
    %7 = vector.broadcast %cst_5 : f32 to vector<16x128xf32>
    %8 = arith.mulf %6, %7 : vector<16x128xf32>
    %cst_6 = arith.constant 0.707106769 : f32
    %9 = vector.broadcast %cst_6 : f32 to vector<16x128xf32>
    %10 = arith.mulf %6, %9 : vector<16x128xf32>
    %11 = math.erf %10 : vector<16x128xf32>
    %cst_7 = arith.constant 1.000000e+00 : f32
    %12 = vector.broadcast %cst_7 : f32 to vector<16x128xf32>
    %13 = arith.addf %12, %11 : vector<16x128xf32>
    %14 = arith.mulf %8, %13 : vector<16x128xf32>
    %c0_8 = arith.constant 0 : index
    %c0_9 = arith.constant 0 : index
    %15 = vector.load %arg5[%c0_8, %c0_9] : memref<1x128xf32, #tpu.memory_space<vmem>>, vector<1x128xf32>
    %c0_10 = arith.constant 0 : index
    %c0_11 = arith.constant 0 : index
    %16 = vector.load %arg6[%c0_10, %c0_11] : memref<1x128xf32, #tpu.memory_space<vmem>>, vector<1x128xf32>
    %cst_12 = arith.constant dense<0.000000e+00> : vector<16xf32>
    %17 = vector.multi_reduction <add>, %14, %cst_12 [1] : vector<16x128xf32> to vector<16xf32>
    %18 = vector.shape_cast %17 : vector<16xf32> to vector<16x1xf32>
    %cst_13 = arith.constant 1.280000e+02 : f32
    %19 = vector.broadcast %cst_13 : f32 to vector<16x1xf32>
    %20 = arith.divf %18, %19 : vector<16x1xf32>
    %21 = vector.broadcast %20 : vector<16x1xf32> to vector<16x128xf32>
    %22 = arith.subf %14, %21 : vector<16x128xf32>
    %23 = arith.mulf %22, %22 : vector<16x128xf32>
    %cst_14 = arith.constant dense<0.000000e+00> : vector<16xf32>
    %24 = vector.multi_reduction <add>, %23, %cst_14 [1] : vector<16x128xf32> to vector<16xf32>
    %25 = vector.shape_cast %24 : vector<16xf32> to vector<16x1xf32>
    %cst_15 = arith.constant 1.280000e+02 : f32
    %26 = vector.broadcast %cst_15 : f32 to vector<16x1xf32>
    %27 = arith.divf %25, %26 : vector<16x1xf32>
    %28 = vector.broadcast %20 : vector<16x1xf32> to vector<16x128xf32>
    %29 = arith.subf %14, %28 : vector<16x128xf32>
    %cst_16 = arith.constant 9.99999996E-13 : f32
    %30 = vector.broadcast %cst_16 : f32 to vector<16x1xf32>
    %31 = arith.addf %27, %30 : vector<16x1xf32>
    %32 = math.rsqrt %31 : vector<16x1xf32>
    %33 = vector.broadcast %32 : vector<16x1xf32> to vector<16x128xf32>
    %34 = arith.mulf %29, %33 : vector<16x128xf32>
    %35 = vector.broadcast %15 : vector<1x128xf32> to vector<16x128xf32>
    %36 = arith.mulf %34, %35 : vector<16x128xf32>
    %37 = vector.broadcast %16 : vector<1x128xf32> to vector<16x128xf32>
    %38 = arith.addf %36, %37 : vector<16x128xf32>
    %39 = arith.truncf %38 : vector<16x128xf32> to vector<16x128xbf16>
    %c0_17 = arith.constant 0 : index
    %c0_18 = arith.constant 0 : index
    %40 = vector.load %arg7[%c0_17, %c0_18] : memref<512x128xbf16, #tpu.memory_space<vmem>>, vector<512x128xbf16>
    %cst_19 = arith.constant dense<0.000000e+00> : vector<16x512xf32>
    %41 = tpu.matmul %39, %40, %cst_19 {dimension_numbers = #tpu.dot_dimension_numbers<[1], [1], [0], [0], [0, 0, 1, 0], [], []>} : vector<16x128xbf16>, vector<512x128xbf16>, vector<16x512xf32> -> vector<16x512xf32>
    %c0_20 = arith.constant 0 : index
    %c0_21 = arith.constant 0 : index
    %42 = vector.load %arg8[%c0_20, %c0_21] : memref<1x512xf32, #tpu.memory_space<vmem>>, vector<1x512xf32>
    %43 = vector.broadcast %42 : vector<1x512xf32> to vector<16x512xf32>
    %44 = arith.addf %41, %43 : vector<16x512xf32>
    %c0_22 = arith.constant 0 : index
    %c0_23 = arith.constant 0 : index
    %45 = vector.load %arg9[%c0_22, %c0_23] : memref<16x512xf32, #tpu.memory_space<vmem>>, vector<16x512xf32>
    tpu.vector_store %arg9[%c0_22, %c0_23], %44 {strides = array<i32>} : memref<16x512xf32, #tpu.memory_space<vmem>>, vector<16x512xf32>,
    return
  }
  func.func @transform_0(%arg0: i32, %arg1: i32) -> (i32, i32) {
    %c0_i32 = arith.constant 0 : i32
    %c0_i32_0 = arith.constant 0 : i32
    return %arg0, %c0_i32 : i32, i32
  }
  func.func @transform_1(%arg0: i32, %arg1: i32) -> (i32, i32) {
    %c0_i32 = arith.constant 0 : i32
    %c0_i32_0 = arith.constant 0 : i32
    %c0_i32_1 = arith.constant 0 : i32
    return %c0_i32, %c0_i32_0 : i32, i32
  }
  func.func @transform_2(%arg0: i32, %arg1: i32) -> (i32, i32) {
    %c0_i32 = arith.constant 0 : i32
    %c0_i32_0 = arith.constant 0 : i32
    %c0_i32_1 = arith.constant 0 : i32
    return %c0_i32, %c0_i32_0 : i32, i32
  }
  func.func @transform_3(%arg0: i32, %arg1: i32) -> (i32, i32) {
    %c0_i32 = arith.constant 0 : i32
    %c0_i32_0 = arith.constant 0 : i32
    %c0_i32_1 = arith.constant 0 : i32
    return %c0_i32, %c0_i32_0 : i32, i32
  }
  func.func @transform_4(%arg0: i32, %arg1: i32) -> (i32, i32) {
    %c0_i32 = arith.constant 0 : i32
    %c0_i32_0 = arith.constant 0 : i32
    %c0_i32_1 = arith.constant 0 : i32
    return %c0_i32, %c0_i32_0 : i32, i32
  }
  func.func @transform_5(%arg0: i32, %arg1: i32) -> (i32, i32) {
    %c0_i32 = arith.constant 0 : i32
    %c0_i32_0 = arith.constant 0 : i32
    return %arg1, %c0_i32 : i32, i32
  }
  func.func @transform_6(%arg0: i32, %arg1: i32) -> (i32, i32) {
    %c0_i32 = arith.constant 0 : i32
    %c0_i32_0 = arith.constant 0 : i32
    return %c0_i32, %arg1 : i32, i32
  }
  func.func @transform_7(%arg0: i32, %arg1: i32) -> (i32, i32) {
    %c0_i32 = arith.constant 0 : i32
    return %arg0, %arg1 : i32, i32
  }
}

</mosaic_0001>

<llo_original>
// kernel: tpu_custom_call.1
$region0: #{tpu_custom_call.1}
  #allocation0 [shape = 'u32[]', space=smem, size = 0x4, offset = 0x4, fixed_abs, tag = 'smem constant byte address 0x4 - core index']
  #allocation1 [shape = 'u32[72,128]{1,0:T(1,128)}', space=vmem, size = 0x9000, scoped, tag = 'internal scratch']
  %s0 = inlined_call_operand.hbm [shape: f32[16,128], index: 0, kind: input, shape index: {}]
  %s1 = inlined_call_operand.hbm [shape: bf16[128,128], index: 1, kind: input, shape index: {}]
  %s2 = inlined_call_operand.vmem [shape: f32[1,128], index: 2, kind: input, shape index: {}]
  %s3 = inlined_call_operand.hbm [shape: f32[1,128], index: 3, kind: input, shape index: {}]
  %s4 = inlined_call_operand.hbm [shape: f32[1,128], index: 4, kind: input, shape index: {}]
  %s5 = inlined_call_operand.hbm [shape: bf16[512,128], index: 5, kind: input, shape index: {}]
  %s6 = inlined_call_operand.vmem [shape: f32[1,512], index: 6, kind: input, shape index: {}]
  %s7 = inlined_call_operand.hbm [shape: f32[16,512], index: 7, kind: output, shape index: {}]
  %s8 = sld [smem:[#allocation0]]
  $region58: #{tpu_custom_call.1} parent=0
    _
  %s10 = ssub.s32 1, %s8
  %s11 = scalar_select 0, %s10, %s8
  $region1: #{tpu_custom_call.1} parent=0
    #allocation2 [shape = 'u8[8192]{0}', space=vmem, size = 0x2000, scoped, tag = 'input window, operand 0, single buffered']
    #allocation3 [shape = 's32[1]{0}', space=sflag, size = 0x4, scoped, tag = 'scoped memory for tpu_custom_call.1']
    #allocation4 [shape = 's32[1]{0}', space=sflag, size = 0x4, scoped, tag = 'scoped memory for tpu_custom_call.1']
    #allocation5 [shape = 'u8[32768]{0}', space=vmem, size = 0x8000, scoped, tag = 'input window, operand 1, single buffered']
    #allocation6 [shape = 's32[1]{0}', space=sflag, size = 0x4, scoped, tag = 'scoped memory for tpu_custom_call.1']
    #allocation7 [shape = 'u8[512]{0}', space=vmem, size = 0x400, scoped, tag = 'input window, operand 3, single buffered']
    #allocation8 [shape = 'u8[512]{0}', space=vmem, size = 0x400, scoped, tag = 'input window, operand 4, single buffered']
    #allocation9 [shape = 's32[1]{0}', space=sflag, size = 0x4, scoped, tag = 'scoped memory for tpu_custom_call.1']
    #allocation10 [shape = 'u8[131072]{0}', space=vmem, size = 0x20000, scoped, tag = 'input window, operand 5, single buffered']
    #allocation11 [shape = 'u8[32768]{0}', space=vmem, size = 0x8000, scoped, tag = 'output window, operand 0, single buffered']
    %12 = vsyncpa [#allocation3], 0
    %13 = vsyncpa [#allocation6], 0
    %14 = vsyncpa [#allocation9], 0
    %15 = vsyncpa [#allocation4], 0
    // Predicated region
    $region2: #{tpu_custom_call.1} parent=1 // pred_check
      _
    $region3: #{tpu_custom_call.1} parent=1 // pred_check_branch
      %17 = sbr.rel (0) target = $region5
    $region4: #{tpu_custom_call.1} parent=1 // pred_region
      %19 = vsyncadd [#allocation3], 0
      %s20 = sshll.u32 %s0, 4
      %s21 = int_to_ptr.hbm [resolvable:$true] %s20
      %s22 = sshll.u32 [#allocation2], 4
      %s23 = int_to_ptr.vmem [resolvable:$true] %s22
      %28 = dma.hbm_to_vmem [thread:$0]  %s21, 256, %s23, [#allocation3], 128, 128, 8
    $region5: #{tpu_custom_call.1} parent=1 // pred_fallthru
      _
    // Predicated region
    $region6: #{tpu_custom_call.1} parent=1 // pred_check
      _
    $region7: #{tpu_custom_call.1} parent=1 // pred_check_branch
      %30 = sbr.rel (0) target = $region9
    $region8: #{tpu_custom_call.1} parent=1 // pred_region
      %32 = vsyncadd [#allocation6], 0
      %s33 = sshll.u32 %s1, 4
      %s34 = int_to_ptr.hbm [resolvable:$true] %s33
      %s35 = sshll.u32 [#allocation5], 4
      %s36 = int_to_ptr.vmem [resolvable:$true] %s35
      %41 = dma.hbm_to_vmem [thread:$0]  %s34, 1024, %s36, [#allocation6], 64, 64, 4
    $region9: #{tpu_custom_call.1} parent=1 // pred_fallthru
      _
    // Predicated region
    $region10: #{tpu_custom_call.1} parent=1 // pred_check
      _
    $region11: #{tpu_custom_call.1} parent=1 // pred_check_branch
      %43 = sbr.rel (0) target = $region13
    $region12: #{tpu_custom_call.1} parent=1 // pred_region
      _
    $region13: #{tpu_custom_call.1} parent=1 // pred_fallthru
      _
    // Predicated region
    $region14: #{tpu_custom_call.1} parent=1 // pred_check
      _
    $region15: #{tpu_custom_call.1} parent=1 // pred_check_branch
      %45 = sbr.rel (0) target = $region17
    $region16: #{tpu_custom_call.1} parent=1 // pred_region
      %47 = vsyncadd [#allocation6], 0
      %s49 = sshll.u32 %s3, 4
      %s50 = int_to_ptr.hbm [resolvable:$true] %s49
      %s51 = sshll.u32 [#allocation7], 4
      %s52 = int_to_ptr.vmem [resolvable:$true] %s51
      %54 = dma.hbm_to_vmem [thread:$0]  %s50, 16, %s52, [#allocation6]
    $region17: #{tpu_custom_call.1} parent=1 // pred_fallthru
      _
    // Predicated region
    $region18: #{tpu_custom_call.1} parent=1 // pred_check
      _
    $region19: #{tpu_custom_call.1} parent=1 // pred_check_branch
      %56 = sbr.rel (0) target = $region21
    $region20: #{tpu_custom_call.1} parent=1 // pred_region
      %58 = vsyncadd [#allocation9], 0
      %s60 = sshll.u32 %s4, 4
      %s61 = int_to_ptr.hbm [resolvable:$true] %s60
      %s62 = sshll.u32 [#allocation8], 4
      %s63 = int_to_ptr.vmem [resolvable:$true] %s62
      %65 = dma.hbm_to_vmem [thread:$0]  %s61, 16, %s63, [#allocation9]
    $region21: #{tpu_custom_call.1} parent=1 // pred_fallthru
      _
    // Predicated region
    $region22: #{tpu_custom_call.1} parent=1 // pred_check
      _
    $region23: #{tpu_custom_call.1} parent=1 // pred_check_branch
      %67 = sbr.rel (0) target = $region25
    $region24: #{tpu_custom_call.1} parent=1 // pred_region
      %69 = vsyncadd [#allocation9], 0
      %s70 = sshll.u32 %s5, 4
      %s71 = int_to_ptr.hbm [resolvable:$true] %s70
      %s72 = sshll.u32 [#allocation10], 4
      %s73 = int_to_ptr.vmem [resolvable:$true] %s72
      %78 = dma.hbm_to_vmem [thread:$0]  %s71, 4096, %s73, [#allocation9], 64, 64, 4
    $region25: #{tpu_custom_call.1} parent=1 // pred_fallthru
      _
    // Predicated region
    $region26: #{tpu_custom_call.1} parent=1 // pred_check
      _
    $region27: #{tpu_custom_call.1} parent=1 // pred_check_branch
      %80 = sbr.rel (0) target = $region29
    $region28: #{tpu_custom_call.1} parent=1 // pred_region
      _
    $region29: #{tpu_custom_call.1} parent=1 // pred_fallthru
      _
    // Predicated region
    $region30: #{tpu_custom_call.1} parent=1 // pred_check
      _
    $region31: #{tpu_custom_call.1} parent=1 // pred_check_branch
      %82 = sbr.rel (0) target = $region33
    $region32: #{tpu_custom_call.1} parent=1 // pred_region
      %84 = dma.done [#allocation3], 256
    $region33: #{tpu_custom_call.1} parent=1 // pred_fallthru
      _
    // Predicated region
    $region34: #{tpu_custom_call.1} parent=1 // pred_check
      _
    $region35: #{tpu_custom_call.1} parent=1 // pred_check_branch
      %86 = sbr.rel (0) target = $region37
    $region36: #{tpu_custom_call.1} parent=1 // pred_region
      %88 = dma.done [#allocation6], 1024
    $region37: #{tpu_custom_call.1} parent=1 // pred_fallthru
      _
    // Predicated region
    $region38: #{tpu_custom_call.1} parent=1 // pred_check
      _
    $region39: #{tpu_custom_call.1} parent=1 // pred_check_branch
      %90 = sbr.rel (0) target = $region41
    $region40: #{tpu_custom_call.1} parent=1 // pred_region
      %92 = dma.done [#allocation6], 16
    $region41: #{tpu_custom_call.1} parent=1 // pred_fallthru
      _
    // Predicated region
    $region42: #{tpu_custom_call.1} parent=1 // pred_check
      _
    $region43: #{tpu_custom_call.1} parent=1 // pred_check_branch
      %94 = sbr.rel (0) target = $region45
    $region44: #{tpu_custom_call.1} parent=1 // pred_region
      %96 = dma.done [#allocation9], 16
    $region45: #{tpu_custom_call.1} parent=1 // pred_fallthru
      _
    // Predicated region
    $region46: #{tpu_custom_call.1} parent=1 // pred_check
      _
    $region47: #{tpu_custom_call.1} parent=1 // pred_check_branch
      %98 = sbr.rel (0) target = $region49
    $region48: #{tpu_custom_call.1} parent=1 // pred_region
      %100 = dma.done [#allocation9], 4096
    $region49: #{tpu_custom_call.1} parent=1 // pred_fallthru
      _
    %v101 = vld [vmem:[#allocation2] sm:$0xff]
    %v102 = vld [vmem:[#allocation2 + $0x8] sm:$0xff]
    %v103 = vpack.c.bf16 %v102, %v101
    %v104 = vld [vmem:[#allocation5] sm:$0xf]
    %v105 = vld [vmem:[#allocation5 + $0x4] sm:$0xf]
    %v106 = vld [vmem:[#allocation5 + $0x8] sm:$0xf]
    %v107 = vld [vmem:[#allocation5 + $0xc] sm:$0xf]
    %v108 = vld [vmem:[#allocation5 + $0x10] sm:$0xf]
    %v109 = vld [vmem:[#allocation5 + $0x14] sm:$0xf]
    %v110 = vld [vmem:[#allocation5 + $0x18] sm:$0xf]
    %v111 = vld [vmem:[#allocation5 + $0x1c] sm:$0xf]
    %v112 = vld [vmem:[#allocation5 + $0x20] sm:$0xf]
    %v113 = vld [vmem:[#allocation5 + $0x24] sm:$0xf]
    %v114 = vld [vmem:[#allocation5 + $0x28] sm:$0xf]
    %v115 = vld [vmem:[#allocation5 + $0x2c] sm:$0xf]
    %v116 = vld [vmem:[#allocation5 + $0x30] sm:$0xf]
    %v117 = vld [vmem:[#allocation5 + $0x34] sm:$0xf]
    %v118 = vld [vmem:[#allocation5 + $0x38] sm:$0xf]
    %v119 = vld [vmem:[#allocation5 + $0x3c] sm:$0xf]
    %v120 = vld [vmem:[%s2] sm:$0x1]
    %v122 = vperm.slane %v120, 0
    %v140 = vunpack.c.l.b16 %v104
    %v141 = vunpack.c.l.b16 %v105
    %v142 = vunpack.c.l.b16 %v106
    %v143 = vunpack.c.l.b16 %v107
    %v144 = vunpack.c.l.b16 %v108
    %v145 = vunpack.c.l.b16 %v109
    %v146 = vunpack.c.l.b16 %v110
    %v147 = vunpack.c.l.b16 %v111
    %v148 = vunpack.c.l.b16 %v112
    %v149 = vunpack.c.l.b16 %v113
    %v150 = vunpack.c.l.b16 %v114
    %v151 = vunpack.c.l.b16 %v115
    %v152 = vunpack.c.l.b16 %v116
    %v153 = vunpack.c.l.b16 %v117
    %v154 = vunpack.c.l.b16 %v118
    %v155 = vunpack.c.l.b16 %v119
    %v156 = vpack.c.b16 %v141, %v140
    %v157 = vpack.c.b16 %v143, %v142
    %v158 = vpack.c.b16 %v145, %v144
    %v159 = vpack.c.b16 %v147, %v146
    %v160 = vpack.c.b16 %v149, %v148
    %v161 = vpack.c.b16 %v151, %v150
    %v162 = vpack.c.b16 %v153, %v152
    %v163 = vpack.c.b16 %v155, %v154
    %172 = vmatpush.bf16.xpose.msra.mxu0 %v163
    %173 = vmatpush.bf16.xpose.msra.mxu0 %v162
    %174 = vmatpush.bf16.xpose.msra.mxu0 %v161
    %175 = vmatpush.bf16.xpose.msra.mxu0 %v160
    %176 = vmatpush.bf16.xpose.msra.mxu0 %v159
    %177 = vmatpush.bf16.xpose.msra.mxu0 %v158
    %178 = vmatpush.bf16.xpose.msra.mxu0 %v157
    %179 = vmatpush.bf16.xpose.msra.mxu0 %v156
    %180 = vmatmul.bf16.gmra.mxu0 %v103
    %v181 = vpop.f32.mrf.mxu0
    %v182 = vadd.f32 %v122, %v181
    %v183 = vpop.f32.mrf.mxu0
    %v184 = vadd.f32 %v122, %v183
    %185 = vdwg.mxu0
    %v186 = vmul.f32 %v182, 0.5
    %v187 = vmul.f32 %v184, 0.5
    %v188 = vmul.f32 %v182, 0.70710677
    %v189 = vmul.f32 %v184, 0.70710677
    %v190 = vmul.f32 %v188, %v188
    %v191 = vmin.f32 16.0, %v190
    %v192 = vmul.f32 %v191, 2.1237322e-06
    %v193 = vadd.f32 %v192, 0.00028619796
    %v194 = vmul.f32 %v191, %v193
    %v195 = vadd.f32 %v194, 0.0036580483
    %v196 = vmul.f32 %v191, %v195
    %v197 = vadd.f32 %v196, 0.05243302
    %v198 = vmul.f32 %v191, %v197
    %v199 = vadd.f32 %v198, 0.18741608
    %v200 = vmul.f32 %v191, %v199
    %v201 = vadd.f32 %v200, 1.1283791
    %v202 = vmul.f32 %v188, %v201
    %v203 = vmul.f32 %v191, 3.8918573e-05
    %v204 = vadd.f32 %v203, 0.001143296
    %v205 = vmul.f32 %v191, %v204
    %v206 = vadd.f32 %v205, 0.014752088
    %v207 = vmul.f32 %v191, %v206
    %v208 = vadd.f32 %v207, 0.112945676
    %v209 = vmul.f32 %v191, %v208
    %v210 = vadd.f32 %v209, 0.4994258
    %v211 = vmul.f32 %v191, %v210
    %v212 = vadd.f32 %v211, 1.0
    %v213 = vrcp.pop %v212
    %v214 = vmul.f32 %v212, %v213
    %v215 = vsub.f32 1.0, %v214
    %v216 = vmul.f32 %v213, %v215
    %v217 = vadd.f32 %v213, %v216
    %vm218 = vweird.f32 %v212
    %vm219 = vweird.f32 %v213
    %vm220 = vmor %vm218, %vm219
    %v221 = vsel %vm220, %v213, %v217
    %v222 = vand.u32 2147483647, %v212
    %vm223 = vcmp.eq.f32.partialorder %v222, 8.507059e+37
    %v224 = vand.u32 %v212, 2147483648
    %v225 = vor.u32 1.1754944e-38, %v224
    %v226 = vsel %vm223, %v225, %v221
    %v227 = vmul.f32 %v202, %v226
    %v228 = vmin.f32 %v227, 1.0
    %v229 = vmax.f32 %v228, -1.0
    %v230 = vmul.f32 %v189, %v189
    %v231 = vmin.f32 16.0, %v230
    %v232 = vmul.f32 %v231, 2.1237322e-06
    %v233 = vadd.f32 %v232, 0.00028619796
    %v234 = vmul.f32 %v231, %v233
    %v235 = vadd.f32 %v234, 0.0036580483
    %v236 = vmul.f32 %v231, %v235
    %v237 = vadd.f32 %v236, 0.05243302
    %v238 = vmul.f32 %v231, %v237
    %v239 = vadd.f32 %v238, 0.18741608
    %v240 = vmul.f32 %v231, %v239
    %v241 = vadd.f32 %v240, 1.1283791
    %v242 = vmul.f32 %v189, %v241
    %v243 = vmul.f32 %v231, 3.8918573e-05
    %v244 = vadd.f32 %v243, 0.001143296
    %v245 = vmul.f32 %v231, %v244
    %v246 = vadd.f32 %v245, 0.014752088
    %v247 = vmul.f32 %v231, %v246
    %v248 = vadd.f32 %v247, 0.112945676
    %v249 = vmul.f32 %v231, %v248
    %v250 = vadd.f32 %v249, 0.4994258
    %v251 = vmul.f32 %v231, %v250
    %v252 = vadd.f32 %v251, 1.0
    %v253 = vrcp.pop %v252
    %v254 = vmul.f32 %v252, %v253
    %v255 = vsub.f32 1.0, %v254
    %v256 = vmul.f32 %v253, %v255
    %v257 = vadd.f32 %v253, %v256
    %vm258 = vweird.f32 %v252
    %vm259 = vweird.f32 %v253
    %vm260 = vmor %vm258, %vm259
    %v261 = vsel %vm260, %v253, %v257
    %v262 = vand.u32 2147483647, %v252
    %vm263 = vcmp.eq.f32.partialorder %v262, 8.507059e+37
    %v264 = vand.u32 %v252, 2147483648
    %v265 = vor.u32 1.1754944e-38, %v264
    %v266 = vsel %vm263, %v265, %v261
    %v267 = vmul.f32 %v242, %v266
    %v268 = vmin.f32 %v267, 1.0
    %v269 = vmax.f32 %v268, -1.0
    %v270 = vadd.f32 %v229, 1.0
    %v271 = vadd.f32 %v269, 1.0
    %v272 = vmul.f32 %v186, %v270
    %v273 = vmul.f32 %v187, %v271
    %v274 = vld [vmem:[#allocation7] sm:$0x1]
    %v275 = vld [vmem:[#allocation8] sm:$0x1]
    %276 = vadd.xlane.f32.xlu0 %v272
    %v277 = vpop.xlane.xlu0 %276
    %278 = vadd.xlane.f32.xlu0 %v273
    %v279 = vpop.xlane.xlu0 %278
    %v280 = vrcp.pop 128.0
    %v281 = vmul.f32 128.0, %v280
    %v282 = vsub.f32 1.0, %v281
    %v283 = vmul.f32 %v280, %v282
    %v284 = vadd.f32 %v280, %v283
    %vm285 = vweird.f32 %v280
    %v286 = vsel %vm285, %v280, %v284
    %v287 = vmul.f32 %v277, %v286
    %v288 = vmul.f32 %v279, %v286
    %v289 = vsub.f32 %v272, %v287
    %v290 = vsub.f32 %v273, %v288
    %v291 = vmul.f32 %v289, %v289
    %v292 = vmul.f32 %v290, %v290
    %293 = vadd.xlane.f32.xlu0 %v291
    %v294 = vpop.xlane.xlu0 %293
    %295 = vadd.xlane.f32.xlu0 %v292
    %v296 = vpop.xlane.xlu0 %295
    %v297 = vmul.f32 %v294, %v286
    %v298 = vmul.f32 %v296, %v286
    %v299 = vadd.f32 %v297, 1e-12
    %v300 = vadd.f32 %v298, 1e-12
    %v301 = vrsqrt.pop %v299
    %v302 = vmul.f32 %v301, %v299
    %v303 = vmul.f32 %v302, %v301
    %v304 = vmul.f32 0.5, %v303
    %v305 = vsub.f32 1.5, %v304
    %v306 = vmul.f32 %v301, %v305
    %vm307 = vweird.f32 %v299
    %vm308 = vweird.f32 %v301
    %vm309 = vmor %vm307, %vm308
    %v310 = vsel %vm309, %v301, %v306
    %v311 = vrsqrt.pop %v300
    %v312 = vmul.f32 %v311, %v300
    %v313 = vmul.f32 %v312, %v311
    %v314 = vmul.f32 0.5, %v313
    %v315 = vsub.f32 1.5, %v314
    %v316 = vmul.f32 %v311, %v315
    %vm317 = vweird.f32 %v300
    %vm318 = vweird.f32 %v311
    %vm319 = vmor %vm317, %vm318
    %v320 = vsel %vm319, %v311, %v316
    %v321 = vmul.f32 %v289, %v310
    %v322 = vmul.f32 %v290, %v320
    %v324 = vperm.slane %v274, 0
    %v326 = vmul.f32 %v321, %v324
    %v327 = vmul.f32 %v322, %v324
    %v329 = vperm.slane %v275, 0
    %v331 = vadd.f32 %v326, %v329
    %v332 = vadd.f32 %v327, %v329
    %v333 = vpack.c.bf16 %v332, %v331
    %v334 = vld [vmem:[#allocation10] sm:$0xf]
    %v335 = vld [vmem:[#allocation10 + $0x4] sm:$0xf]
    %v336 = vld [vmem:[#allocation10 + $0x8] sm:$0xf]
    %v337 = vld [vmem:[#allocation10 + $0xc] sm:$0xf]
    %v338 = vld [vmem:[#allocation10 + $0x10] sm:$0xf]
    %v339 = vld [vmem:[#allocation10 + $0x14] sm:$0xf]
    %v340 = vld [vmem:[#allocation10 + $0x18] sm:$0xf]
    %v341 = vld [vmem:[#allocation10 + $0x1c] sm:$0xf]
    %v342 = vld [vmem:[#allocation10 + $0x20] sm:$0xf]
    %v343 = vld [vmem:[#allocation10 + $0x24] sm:$0xf]
    %v344 = vld [vmem:[#allocation10 + $0x28] sm:$0xf]
    %v345 = vld [vmem:[#allocation10 + $0x2c] sm:$0xf]
    %v346 = vld [vmem:[#allocation10 + $0x30] sm:$0xf]
    %v347 = vld [vmem:[#allocation10 + $0x34] sm:$0xf]
    %v348 = vld [vmem:[#allocation10 + $0x38] sm:$0xf]
    %v349 = vld [vmem:[#allocation10 + $0x3c] sm:$0xf]
    %v350 = vld [vmem:[#allocation10 + $0x40] sm:$0xf]
    %v351 = vld [vmem:[#allocation10 + $0x44] sm:$0xf]
    %v352 = vld [vmem:[#allocation10 + $0x48] sm:$0xf]
    %v353 = vld [vmem:[#allocation10 + $0x4c] sm:$0xf]
    %v354 = vld [vmem:[#allocation10 + $0x50] sm:$0xf]
    %v355 = vld [vmem:[#allocation10 + $0x54] sm:$0xf]
    %v356 = vld [vmem:[#allocation10 + $0x58] sm:$0xf]
    %v357 = vld [vmem:[#allocation10 + $0x5c] sm:$0xf]
    %v358 = vld [vmem:[#allocation10 + $0x60] sm:$0xf]
    %v359 = vld [vmem:[#allocation10 + $0x64] sm:$0xf]
    %v360 = vld [vmem:[#allocation10 + $0x68] sm:$0xf]
    %v361 = vld [vmem:[#allocation10 + $0x6c] sm:$0xf]
    %v362 = vld [vmem:[#allocation10 + $0x70] sm:$0xf]
    %v363 = vld [vmem:[#allocation10 + $0x74] sm:$0xf]
    %v364 = vld [vmem:[#allocation10 + $0x78] sm:$0xf]
    %v365 = vld [vmem:[#allocation10 + $0x7c] sm:$0xf]
    %v366 = vld [vmem:[#allocation10 + $0x80] sm:$0xf]
    %v367 = vld [vmem:[#allocation10 + $0x84] sm:$0xf]
    %v368 = vld [vmem:[#allocation10 + $0x88] sm:$0xf]
    %v369 = vld [vmem:[#allocation10 + $0x8c] sm:$0xf]
    %v370 = vld [vmem:[#allocation10 + $0x90] sm:$0xf]
    %v371 = vld [vmem:[#allocation10 + $0x94] sm:$0xf]
    %v372 = vld [vmem:[#allocation10 + $0x98] sm:$0xf]
    %v373 = vld [vmem:[#allocation10 + $0x9c] sm:$0xf]
    %v374 = vld [vmem:[#allocation10 + $0xa0] sm:$0xf]
    %v375 = vld [vmem:[#allocation10 + $0xa4] sm:$0xf]
    %v376 = vld [vmem:[#allocation10 + $0xa8] sm:$0xf]
    %v377 = vld [vmem:[#allocation10 + $0xac] sm:$0xf]
    %v378 = vld [vmem:[#allocation10 + $0xb0] sm:$0xf]
    %v379 = vld [vmem:[#allocation10 + $0xb4] sm:$0xf]
    %v380 = vld [vmem:[#allocation10 + $0xb8] sm:$0xf]
    %v381 = vld [vmem:[#allocation10 + $0xbc] sm:$0xf]
    %v382 = vld [vmem:[#allocation10 + $0xc0] sm:$0xf]
    %v383 = vld [vmem:[#allocation10 + $0xc4] sm:$0xf]
    %v384 = vld [vmem:[#allocation10 + $0xc8] sm:$0xf]
    %v385 = vld [vmem:[#allocation10 + $0xcc] sm:$0xf]
    %v386 = vld [vmem:[#allocation10 + $0xd0] sm:$0xf]
    %v387 = vld [vmem:[#allocation10 + $0xd4] sm:$0xf]
    %v388 = vld [vmem:[#allocation10 + $0xd8] sm:$0xf]
    %v389 = vld [vmem:[#allocation10 + $0xdc] sm:$0xf]
    %v390 = vld [vmem:[#allocation10 + $0xe0] sm:$0xf]
    %v391 = vld [vmem:[#allocation10 + $0xe4] sm:$0xf]
    %v392 = vld [vmem:[#allocation10 + $0xe8] sm:$0xf]
    %v393 = vld [vmem:[#allocation10 + $0xec] sm:$0xf]
    %v394 = vld [vmem:[#allocation10 + $0xf0] sm:$0xf]
    %v395 = vld [vmem:[#allocation10 + $0xf4] sm:$0xf]
    %v396 = vld [vmem:[#allocation10 + $0xf8] sm:$0xf]
    %v397 = vld [vmem:[#allocation10 + $0xfc] sm:$0xf]
    %v398 = vld [vmem:[%s6] sm:$0xf]
    %v400 = vperm.slane %v398, 0
    %v401 = vperm.slane %v398, 1
    %v402 = vperm.slane %v398, 2
    %v403 = vperm.slane %v398, 3
    %v472 = vunpack.c.l.b16 %v334
    %v473 = vunpack.c.l.b16 %v335
    %v474 = vunpack.c.l.b16 %v336
    %v475 = vunpack.c.l.b16 %v337
    %v476 = vunpack.c.l.b16 %v338
    %v477 = vunpack.c.l.b16 %v339
    %v478 = vunpack.c.l.b16 %v340
    %v479 = vunpack.c.l.b16 %v341
    %v480 = vunpack.c.l.b16 %v342
    %v481 = vunpack.c.l.b16 %v343
    %v482 = vunpack.c.l.b16 %v344
    %v483 = vunpack.c.l.b16 %v345
    %v484 = vunpack.c.l.b16 %v346
    %v485 = vunpack.c.l.b16 %v347
    %v486 = vunpack.c.l.b16 %v348
    %v487 = vunpack.c.l.b16 %v349
    %v488 = vunpack.c.l.b16 %v350
    %v489 = vunpack.c.l.b16 %v351
    %v490 = vunpack.c.l.b16 %v352
    %v491 = vunpack.c.l.b16 %v353
    %v492 = vunpack.c.l.b16 %v354
    %v493 = vunpack.c.l.b16 %v355
    %v494 = vunpack.c.l.b16 %v356
    %v495 = vunpack.c.l.b16 %v357
    %v496 = vunpack.c.l.b16 %v358
    %v497 = vunpack.c.l.b16 %v359
    %v498 = vunpack.c.l.b16 %v360
    %v499 = vunpack.c.l.b16 %v361
    %v500 = vunpack.c.l.b16 %v362
    %v501 = vunpack.c.l.b16 %v363
    %v502 = vunpack.c.l.b16 %v364
    %v503 = vunpack.c.l.b16 %v365
    %v504 = vunpack.c.l.b16 %v366
    %v505 = vunpack.c.l.b16 %v367
    %v506 = vunpack.c.l.b16 %v368
    %v507 = vunpack.c.l.b16 %v369
    %v508 = vunpack.c.l.b16 %v370
    %v509 = vunpack.c.l.b16 %v371
    %v510 = vunpack.c.l.b16 %v372
    %v511 = vunpack.c.l.b16 %v373
    %v512 = vunpack.c.l.b16 %v374
    %v513 = vunpack.c.l.b16 %v375
    %v514 = vunpack.c.l.b16 %v376
    %v515 = vunpack.c.l.b16 %v377
    %v516 = vunpack.c.l.b16 %v378
    %v517 = vunpack.c.l.b16 %v379
    %v518 = vunpack.c.l.b16 %v380
    %v519 = vunpack.c.l.b16 %v381
    %v520 = vunpack.c.l.b16 %v382
    %v521 = vunpack.c.l.b16 %v383
    %v522 = vunpack.c.l.b16 %v384
    %v523 = vunpack.c.l.b16 %v385
    %v524 = vunpack.c.l.b16 %v386
    %v525 = vunpack.c.l.b16 %v387
    %v526 = vunpack.c.l.b16 %v388
    %v527 = vunpack.c.l.b16 %v389
    %v528 = vunpack.c.l.b16 %v390
    %v529 = vunpack.c.l.b16 %v391
    %v530 = vunpack.c.l.b16 %v392
    %v531 = vunpack.c.l.b16 %v393
    %v532 = vunpack.c.l.b16 %v394
    %v533 = vunpack.c.l.b16 %v395
    %v534 = vunpack.c.l.b16 %v396
    %v535 = vunpack.c.l.b16 %v397
    %v536 = vpack.c.b16 %v473, %v472
    %v537 = vpack.c.b16 %v475, %v474
    %v538 = vpack.c.b16 %v477, %v476
    %v539 = vpack.c.b16 %v479, %v478
    %v540 = vpack.c.b16 %v481, %v480
    %v541 = vpack.c.b16 %v483, %v482
    %v542 = vpack.c.b16 %v485, %v484
    %v543 = vpack.c.b16 %v487, %v486
    %v544 = vpack.c.b16 %v489, %v488
    %v545 = vpack.c.b16 %v491, %v490
    %v546 = vpack.c.b16 %v493, %v492
    %v547 = vpack.c.b16 %v495, %v494
    %v548 = vpack.c.b16 %v497, %v496
    %v549 = vpack.c.b16 %v499, %v498
    %v550 = vpack.c.b16 %v501, %v500
    %v551 = vpack.c.b16 %v503, %v502
    %v552 = vpack.c.b16 %v505, %v504
    %v553 = vpack.c.b16 %v507, %v506
    %v554 = vpack.c.b16 %v509, %v508
    %v555 = vpack.c.b16 %v511, %v510
    %v556 = vpack.c.b16 %v513, %v512
    %v557 = vpack.c.b16 %v515, %v514
    %v558 = vpack.c.b16 %v517, %v516
    %v559 = vpack.c.b16 %v519, %v518
    %v560 = vpack.c.b16 %v521, %v520
    %v561 = vpack.c.b16 %v523, %v522
    %v562 = vpack.c.b16 %v525, %v524
    %v563 = vpack.c.b16 %v527, %v526
    %v564 = vpack.c.b16 %v529, %v528
    %v565 = vpack.c.b16 %v531, %v530
    %v566 = vpack.c.b16 %v533, %v532
    %v567 = vpack.c.b16 %v535, %v534
    %600 = vmatpush.bf16.xpose.msra.mxu0 %v543
    %601 = vmatpush.bf16.xpose.msra.mxu0 %v542
    %602 = vmatpush.bf16.xpose.msra.mxu0 %v541
    %603 = vmatpush.bf16.xpose.msra.mxu0 %v540
    %604 = vmatpush.bf16.xpose.msra.mxu0 %v539
    %605 = vmatpush.bf16.xpose.msra.mxu0 %v538
    %606 = vmatpush.bf16.xpose.msra.mxu0 %v537
    %607 = vmatpush.bf16.xpose.msra.mxu0 %v536
    %608 = vmatmul.bf16.gmra.mxu0 %v333
    %v609 = vpop.f32.mrf.mxu0
    %v610 = vadd.f32 %v400, %v609
    %v611 = vpop.f32.mrf.mxu0
    %v612 = vadd.f32 %v400, %v611
    %613 = vdwg.mxu0
    %614 = vmatpush.bf16.xpose.msra.mxu0 %v551
    %615 = vmatpush.bf16.xpose.msra.mxu0 %v550
    %616 = vmatpush.bf16.xpose.msra.mxu0 %v549
    %617 = vmatpush.bf16.xpose.msra.mxu0 %v548
    %618 = vmatpush.bf16.xpose.msra.mxu0 %v547
    %619 = vmatpush.bf16.xpose.msra.mxu0 %v546
    %620 = vmatpush.bf16.xpose.msra.mxu0 %v545
    %621 = vmatpush.bf16.xpose.msra.mxu0 %v544
    %622 = vmatmul.bf16.gmra.mxu0 %v333
    %v623 = vpop.f32.mrf.mxu0
    %v624 = vadd.f32 %v401, %v623
    %v625 = vpop.f32.mrf.mxu0
    %v626 = vadd.f32 %v401, %v625
    %627 = vdwg.mxu0
    %628 = vmatpush.bf16.xpose.msra.mxu0 %v559
    %629 = vmatpush.bf16.xpose.msra.mxu0 %v558
    %630 = vmatpush.bf16.xpose.msra.mxu0 %v557
    %631 = vmatpush.bf16.xpose.msra.mxu0 %v556
    %632 = vmatpush.bf16.xpose.msra.mxu0 %v555
    %633 = vmatpush.bf16.xpose.msra.mxu0 %v554
    %634 = vmatpush.bf16.xpose.msra.mxu0 %v553
    %635 = vmatpush.bf16.xpose.msra.mxu0 %v552
    %636 = vmatmul.bf16.gmra.mxu0 %v333
    %v637 = vpop.f32.mrf.mxu0
    %v638 = vadd.f32 %v402, %v637
    %v639 = vpop.f32.mrf.mxu0
    %v640 = vadd.f32 %v402, %v639
    %641 = vdwg.mxu0
    %642 = vmatpush.bf16.xpose.msra.mxu0 %v567
    %643 = vmatpush.bf16.xpose.msra.mxu0 %v566
    %644 = vmatpush.bf16.xpose.msra.mxu0 %v565
    %645 = vmatpush.bf16.xpose.msra.mxu0 %v564
    %646 = vmatpush.bf16.xpose.msra.mxu0 %v563
    %647 = vmatpush.bf16.xpose.msra.mxu0 %v562
    %648 = vmatpush.bf16.xpose.msra.mxu0 %v561
    %649 = vmatpush.bf16.xpose.msra.mxu0 %v560
    %650 = vmatmul.bf16.gmra.mxu0 %v333
    %v651 = vpop.f32.mrf.mxu0
    %v652 = vadd.f32 %v403, %v651
    %v653 = vpop.f32.mrf.mxu0
    %v654 = vadd.f32 %v403, %v653
    %655 = vdwg.mxu0
    %656 = vst [vmem:[#allocation11] sm:$0xff] %v610
    %657 = vst [vmem:[#allocation11 + $0x8] sm:$0xff] %v624
    %658 = vst [vmem:[#allocation11 + $0x10] sm:$0xff] %v638
    %659 = vst [vmem:[#allocation11 + $0x18] sm:$0xff] %v652
    %660 = vst [vmem:[#allocation11 + $0x20] sm:$0xff] %v612
    %661 = vst [vmem:[#allocation11 + $0x28] sm:$0xff] %v626
    %662 = vst [vmem:[#allocation11 + $0x30] sm:$0xff] %v640
    %663 = vst [vmem:[#allocation11 + $0x38] sm:$0xff] %v654
    // Predicated region
    $region50: #{tpu_custom_call.1} parent=1 // pred_check
      _
    $region51: #{tpu_custom_call.1} parent=1 // pred_check_branch
      %665 = sbr.rel (0) target = $region53
    $region52: #{tpu_custom_call.1} parent=1 // pred_region
      %667 = vsyncadd [#allocation4], 0
      %s668 = sshll.u32 [#allocation11], 4
      %s669 = int_to_ptr.vmem [resolvable:$true] %s668
      %s670 = sshll.u32 %s7, 4
      %s671 = int_to_ptr.hbm [resolvable:$true] %s670
      %676 = dma.vmem_to_hbm [thread:$0]  %s669, 1024, %s671, [#allocation4], 512, 512, 32
    $region53: #{tpu_custom_call.1} parent=1 // pred_fallthru
      _
    // Predicated region
    $region54: #{tpu_custom_call.1} parent=1 // pred_check
      _
    $region55: #{tpu_custom_call.1} parent=1 // pred_check_branch
      %678 = sbr.rel (0) target = $region57
    $region56: #{tpu_custom_call.1} parent=1 // pred_region
      %680 = dma.done [#allocation4], 1024
    $region57: #{tpu_custom_call.1} parent=1 // pred_fallthru
      _
    %681 = vsyncpa [#allocation3], 1
    %682 = vsyncpa [#allocation6], 1
    %683 = vsyncpa [#allocation9], 1
    %684 = vsyncpa [#allocation4], 1

</llo_original>
